<compile_context>
chip_gen: v5e
topology: v5e:2x2
jax: 0.10.0
libtpu: 0.0.40
codegen_flags: <defaults>
</compile_context>

<pallas_src>
import functools
import math

import jax
import jax.numpy as jnp
from jax.experimental import pallas as pl
from jax.experimental.pallas import tpu as pltpu


def _mha_fused_kernel(x_ref, wqkv_ref, wp_ref, bp_ref, o_ref, *, batch, seq, head):
    """Single invocation (grid=()); all refs are whole arrays resident in VMEM.

    x_ref    : (B*T, C)      bf16 input (flattened in the wrapper)
    wqkv_ref : (C, 3H)       bf16 fused [Wq | Wk | Wv], pre-transposed
    wp_ref   : (H, E_pad)    bf16 output projection, zero-padded to 128 lanes
    bp_ref   : (1, E_pad)    f32 output bias, zero-padded
    o_ref    : (B*T, E_pad)  f32 output — one unmasked, lane-dense store
    """
    B, T, H = batch, seq, head

    # Quirk preserved: len(k) in the reference is the batch size B.
    inv_scale = 1.0 / math.sqrt(B)

    # One fused MXU pass for Q, K and V (bf16 operands, f32 accumulation).
    qkv = jnp.dot(x_ref[...], wqkv_ref[...],
                  preferred_element_type=jnp.float32)            # (B*T, 3H) f32
    q = qkv[:, 0 * H:1 * H].reshape(B, T, H).astype(jnp.bfloat16)
    k = qkv[:, 1 * H:2 * H].reshape(B, T, H).astype(jnp.bfloat16)
    v = qkv[:, 2 * H:3 * H].reshape(B, T, H).astype(jnp.bfloat16)

    # Batched q @ k^T — one batched MXU matmul instead of B separate dots.
    scores = jnp.einsum("bth,bsh->bts", q, k,
                        preferred_element_type=jnp.float32)      # (B, T, T) f32

    # Causal mask built once in-kernel (>=2D iota as required on TPU).
    row = jax.lax.broadcasted_iota(jnp.int32, (T, T), 0)
    col = jax.lax.broadcasted_iota(jnp.int32, (T, T), 1)
    causal = (col <= row)[None, :, :]                            # (1, T, T)

    # Mask (-inf for every batch element) + scale, all in f32.
    scaled = jnp.where(causal, scores * inv_scale, -jnp.inf)

    # softmax over the BATCH axis (dim=0 in the reference). Fully-masked
    # positions become NaN (-inf - -inf), exactly as in PyTorch.
    m = jnp.max(scaled, axis=0, keepdims=True)                   # (1, T, T)
    e = jnp.exp(scaled - m)                                      # (B, T, T)  EUP
    denom = jnp.sum(e, axis=0, keepdims=True)                    # (1, T, T)
    alpha = e * pl.reciprocal(denom, approx=True)                # one EUP reciprocal

    # Batched context matmul; torch.cat along dim 0 == reshape since num_heads == 1.
    ctx = jnp.einsum("bts,bsh->bth", alpha.astype(jnp.bfloat16), v,
                     preferred_element_type=jnp.float32)         # (B, T, H) f32
    ctx2d = ctx.reshape(B * T, H)

    # Fused projection matmul + bias, single 128-lane-dense store.
    y = jnp.dot(ctx2d.astype(jnp.bfloat16), wp_ref[...],
                preferred_element_type=jnp.float32) + bp_ref[...]
    o_ref[...] = y.astype(o_ref.dtype)


def multi_head_attention(x, wq, wk, wv, wp, bp, *, num_heads):
    """x: (B,T,C); wq/wk/wv: (num_heads, head_size, C) [torch Linear (out,in)];
    wp: (n_embd, head_size*num_heads); bp: (n_embd,).
    Returns (num_heads*B, T, n_embd) — matches torch.cat(context) along dim 0."""
    B, T, C = x.shape
    H = wq.shape[1]
    E, in_f = wp.shape
    # The reference forward only shape-checks for num_heads == 1 (dim-0 concat
    # followed by Linear(head_size*num_heads, n_embd)); guard explicitly.
    if num_heads != 1 or in_f != H * num_heads:
        raise ValueError("the reference MultiHeadAttention forward only works for num_heads == 1")

    lane = 128
    e_pad = pl.cdiv(E, lane) * lane

    # Wrapper-side glue:
    #  * flatten x so Q/K/V come from ONE matmul,
    #  * fuse + pre-transpose the three projections into (C, 3H),
    #  * bf16 matmul operands (f32 accumulation in-kernel),
    #  * zero-pad the projection to 128 output lanes so the kernel's only store
    #    is unmasked / lane-dense (padding sliced off below).
    x2d = x.reshape(B * T, C).astype(jnp.bfloat16)
    wqkv = jnp.concatenate([wq[0].T, wk[0].T, wv[0].T], axis=1).astype(jnp.bfloat16)  # (C, 3H)
    wp_pad = jnp.zeros((in_f, e_pad), jnp.float32).at[:, :E].set(wp.T).astype(jnp.bfloat16)
    bp_pad = jnp.zeros((1, e_pad), jnp.float32).at[:, :E].set(bp.astype(jnp.float32))

    flops = (2 * B * T * C * 3 * H          # fused QKV
             + 2 * B * T * T * H            # scores
             + 2 * B * T * T * H            # alpha @ v
             + 2 * B * T * H * e_pad)       # projection
    bytes_accessed = (x2d.size * 2 + wqkv.size * 2 + wp_pad.size * 2
                      + bp_pad.size * 4 + B * T * e_pad * 4)
    cost = pl.CostEstimate(flops=flops,
                           transcendentals=B * T * T + T * T,
                           bytes_accessed=bytes_accessed)

    kernel = functools.partial(_mha_fused_kernel, batch=B, seq=T, head=H)

    out_pad = pl.pallas_call(
        kernel,
        out_shape=jax.ShapeDtypeStruct((B * T, e_pad), jnp.float32),
        in_specs=[pl.BlockSpec(memory_space=pltpu.MemorySpace.VMEM)] * 4,
        out_specs=pl.BlockSpec(memory_space=pltpu.MemorySpace.VMEM),
        cost_estimate=cost,
    )(x2d, wqkv, wp_pad, bp_pad)

    return out_pad[:, :E].reshape(num_heads * B, T, E)


def _reference(x, wq, wk, wv, wp, bp, *, num_heads):
    """Pure-JAX transcription of the PyTorch forward (eval mode), quirks included."""
    B, T, C = x.shape
    mask = jnp.tril(jnp.ones((T, T), jnp.float32))
    contexts = []
    for h in range(num_heads):
        q = jnp.einsum("btc,hc->bth", x, wq[h])
        k = jnp.einsum("btc,hc->bth", x, wk[h])
        v = jnp.einsum("btc,hc->bth", x, wv[h])
        wx = jnp.einsum("bth,bsh->bts", q, k)
        wx = jnp.where(mask[None] == 0, -jnp.inf, wx)
        wx = wx / math.sqrt(B)                       # len(k) == B in the reference
        m = jnp.max(wx, axis=0, keepdims=True)       # softmax over dim=0 (batch)
        e = jnp.exp(wx - m)
        alpha = e / jnp.sum(e, axis=0, keepdims=True)
        contexts.append(jnp.einsum("bts,bsh->bth", alpha, v))
    out = jnp.concatenate(contexts, axis=0)          # torch.cat(context) -> dim 0
    return out @ wp.T + bp                           # dropout = identity (eval)


if __name__ == "__main__":
    # Small synthetic config consistent with the module's forward
    # (num_heads=1 is the only configuration for which the reference forward
    #  shape-checks, because of the dim-0 concat + Linear(head_size*num_heads, n_embd)).
    B, T = 2, 8
    n_embd = 32
    num_heads, head_size = 1, 16

    key = jax.random.PRNGKey(0)
    kx, kq, kk, kv, kp, kb = jax.random.split(key, 6)

    x = jax.random.normal(kx, (B, T, n_embd), jnp.float32)
    wq = 0.02 * jax.random.normal(kq, (num_heads, head_size, n_embd), jnp.float32)
    wk = 0.02 * jax.random.normal(kk, (num_heads, head_size, n_embd), jnp.float32)
    wv = 0.02 * jax.random.normal(kv, (num_heads, head_size, n_embd), jnp.float32)
    wp = 0.02 * jax.random.normal(kp, (n_embd, head_size * num_heads), jnp.float32)
    bp = 0.02 * jax.random.normal(kb, (n_embd,), jnp.float32)

    mha = jax.jit(multi_head_attention, static_argnames=("num_heads",))
    out = mha(x, wq, wk, wv, wp, bp, num_heads=num_heads)
    out = jax.block_until_ready(out)

    ref = _reference(x, wq, wk, wv, wp, bp, num_heads=num_heads)
    assert out.shape == (num_heads * B, T, n_embd)
    # NaNs in causally fully-masked positions are expected and must match.
    # Tolerance loosened slightly for bf16 MXU operands (f32 accumulation).
    assert bool(jnp.allclose(out, ref, rtol=2e-2, atol=1e-2, equal_nan=True))

    print("KERNEL_OK")
</pallas_src>

<mosaic_0001>
module attributes {stable_mosaic.version = 11 : i64} {
  func.func @_mha_fused_kernel(%arg0: memref<16x32xbf16, #tpu.memory_space<vmem>>, %arg1: memref<32x48xbf16, #tpu.memory_space<vmem>>, %arg2: memref<16x128xbf16, #tpu.memory_space<vmem>>, %arg3: memref<1x128xf32, #tpu.memory_space<vmem>>, %arg4: memref<16x128xf32, #tpu.memory_space<vmem>>) attributes {dimension_semantics = [], scalar_prefetch = 0 : i64, scratch_operands = 0 : i64, tpu.core_type = #tpu.core_type<tc>} {
    %c0 = arith.constant 0 : index
    %c0_0 = arith.constant 0 : index
    %0 = vector.load %arg0[%c0, %c0_0] : memref<16x32xbf16, #tpu.memory_space<vmem>>, vector<16x32xbf16>
    %c0_1 = arith.constant 0 : index
    %c0_2 = arith.constant 0 : index
    %1 = vector.load %arg1[%c0_1, %c0_2] : memref<32x48xbf16, #tpu.memory_space<vmem>>, vector<32x48xbf16>
    %cst = arith.constant dense<0.000000e+00> : vector<16x48xf32>
    %2 = tpu.matmul %0, %1, %cst {dimension_numbers = #tpu.dot_dimension_numbers<[1], [0], [0], [1], [0, 0, 1, 1], [], []>} : vector<16x32xbf16>, vector<32x48xbf16>, vector<16x48xf32> -> vector<16x48xf32>
    %3 = vector.extract_strided_slice %2 {offsets = [0, 0], sizes = [16, 16], strides = [1, 1]} : vector<16x48xf32> to vector<16x16xf32>
    %4 = vector.shape_cast %3 : vector<16x16xf32> to vector<2x8x16xf32>
    %5 = arith.truncf %4 : vector<2x8x16xf32> to vector<2x8x16xbf16>
    %6 = vector.extract_strided_slice %2 {offsets = [0, 16], sizes = [16, 16], strides = [1, 1]} : vector<16x48xf32> to vector<16x16xf32>
    %7 = vector.shape_cast %6 : vector<16x16xf32> to vector<2x8x16xf32>
    %8 = arith.truncf %7 : vector<2x8x16xf32> to vector<2x8x16xbf16>
    %9 = vector.extract_strided_slice %2 {offsets = [0, 32], sizes = [16, 16], strides = [1, 1]} : vector<16x48xf32> to vector<16x16xf32>
    %10 = vector.shape_cast %9 : vector<16x16xf32> to vector<2x8x16xf32>
    %11 = arith.truncf %10 : vector<2x8x16xf32> to vector<2x8x16xbf16>
    "tpu.trace_start"() <{level = 10 : i32, message = "bth,bsh->bts"}> : () -> ()
    %cst_3 = arith.constant dense<0.000000e+00> : vector<2x8x8xf32>
    %12 = tpu.matmul %5, %8, %cst_3 {dimension_numbers = #tpu.dot_dimension_numbers<[2], [2], [1], [1], [0, 0, 0, 1, 1, 1], [0], [0]>} : vector<2x8x16xbf16>, vector<2x8x16xbf16>, vector<2x8x8xf32> -> vector<2x8x8xf32>
    "tpu.trace_stop"() : () -> ()
    %13 = tpu.iota {dimensions = array<i32: 0>} : vector<8x8xi32>
    %14 = tpu.iota {dimensions = array<i32: 1>} : vector<8x8xi32>
    %15 = arith.cmpi sle, %14, %13 : vector<8x8xi32>
    %16 = vector.shape_cast %15 : vector<8x8xi1> to vector<1x8x8xi1>
    %cst_4 = arith.constant 0.707106769 : f32
    %17 = vector.broadcast %cst_4 : f32 to vector<2x8x8xf32>
    %18 = arith.mulf %12, %17 : vector<2x8x8xf32>
    %cst_5 = arith.constant 0xFF800000 : f32
    %19 = vector.shape_cast %16 : vector<1x8x8xi1> to vector<1x8x8xi1>
    %20 = vector.broadcast %19 : vector<1x8x8xi1> to vector<2x8x8xi1>
    %21 = vector.broadcast %cst_5 : f32 to vector<2x8x8xf32>
    %22 = arith.select %20, %18, %21 : vector<2x8x8xi1>, vector<2x8x8xf32>
    %cst_6 = arith.constant dense<0xFF800000> : vector<8x8xf32>
    %23 = vector.multi_reduction <maximumf>, %22, %cst_6 [0] : vector<2x8x8xf32> to vector<8x8xf32>
    %24 = vector.shape_cast %23 : vector<8x8xf32> to vector<1x8x8xf32>
    %25 = vector.broadcast %24 : vector<1x8x8xf32> to vector<2x8x8xf32>
    %26 = arith.subf %22, %25 : vector<2x8x8xf32>
    %27 = math.exp %26 : vector<2x8x8xf32>
    %cst_7 = arith.constant dense<0.000000e+00> : vector<8x8xf32>
    %28 = vector.multi_reduction <add>, %27, %cst_7 [0] : vector<2x8x8xf32> to vector<8x8xf32>
    %29 = vector.shape_cast %28 : vector<8x8xf32> to vector<1x8x8xf32>
    %30 = tpu.reciprocal %29 {approx = true} : vector<1x8x8xf32> -> vector<1x8x8xf32>
    %31 = vector.broadcast %30 : vector<1x8x8xf32> to vector<2x8x8xf32>
    %32 = arith.mulf %27, %31 : vector<2x8x8xf32>
    %33 = arith.truncf %32 : vector<2x8x8xf32> to vector<2x8x8xbf16>
    "tpu.trace_start"() <{level = 10 : i32, message = "bts,bsh->bth"}> : () -> ()
    %cst_8 = arith.constant dense<0.000000e+00> : vector<2x8x16xf32>
    %34 = tpu.matmul %33, %11, %cst_8 {dimension_numbers = #tpu.dot_dimension_numbers<[2], [1], [1], [2], [0, 0, 0, 1, 1, 2], [0], [0]>} : vector<2x8x8xbf16>, vector<2x8x16xbf16>, vector<2x8x16xf32> -> vector<2x8x16xf32>
    "tpu.trace_stop"() : () -> ()
    %35 = vector.shape_cast %34 : vector<2x8x16xf32> to vector<16x16xf32>
    %36 = arith.truncf %35 : vector<16x16xf32> to vector<16x16xbf16>
    %c0_9 = arith.constant 0 : index
    %c0_10 = arith.constant 0 : index
    %37 = vector.load %arg2[%c0_9, %c0_10] : memref<16x128xbf16, #tpu.memory_space<vmem>>, vector<16x128xbf16>
    %cst_11 = arith.constant dense<0.000000e+00> : vector<16x128xf32>
    %38 = tpu.matmul %36, %37, %cst_11 {dimension_numbers = #tpu.dot_dimension_numbers<[1], [0], [0], [1], [0, 0, 1, 1], [], []>} : vector<16x16xbf16>, vector<16x128xbf16>, vector<16x128xf32> -> vector<16x128xf32>
    %c0_12 = arith.constant 0 : index
    %c0_13 = arith.constant 0 : index
    %39 = vector.load %arg3[%c0_12, %c0_13] : memref<1x128xf32, #tpu.memory_space<vmem>>, vector<1x128xf32>
    %40 = vector.broadcast %39 : vector<1x128xf32> to vector<16x128xf32>
    %41 = arith.addf %38, %40 : vector<16x128xf32>
    %c0_14 = arith.constant 0 : index
    %c0_15 = arith.constant 0 : index
    %42 = vector.load %arg4[%c0_14, %c0_15] : memref<16x128xf32, #tpu.memory_space<vmem>>, vector<16x128xf32>
    tpu.vector_store %arg4[%c0_14, %c0_15], %41 {strides = array<i32>} : memref<16x128xf32, #tpu.memory_space<vmem>>, vector<16x128xf32>,
    return
  }
}

</mosaic_0001>

<llo_original>
// kernel: multi_head_attention.1
$region0: #{multi_head_attention.1}
  #allocation0 [shape = 'u32[]', space=smem, size = 0x4, offset = 0x4, fixed_abs, tag = 'smem constant byte address 0x4 - core index']
  #allocation1 [shape = 'u32[72,128]{1,0:T(1,128)}', space=vmem, size = 0x9000, scoped, tag = 'internal scratch']
  %s0 = inlined_call_operand.vmem [shape: bf16[16,32], index: 0, kind: input, shape index: {}]
  %s1 = inlined_call_operand.vmem [shape: bf16[32,48], index: 1, kind: input, shape index: {}]
  %s2 = inlined_call_operand.vmem [shape: bf16[16,128], index: 2, kind: input, shape index: {}]
  %s3 = inlined_call_operand.vmem [shape: f32[1,128], index: 3, kind: input, shape index: {}]
  %s4 = inlined_call_operand.vmem [shape: f32[16,128], index: 4, kind: output, shape index: {}]
  %s5 = sld [smem:[#allocation0]]
  $region26: #{multi_head_attention.1} parent=0
    _
  %s7 = ssub.s32 1, %s5
  %s8 = scalar_select 0, %s7, %s5
  // Predicated region
  $region2: #{multi_head_attention.1} parent=0 // pred_check
    _
  $region3: #{multi_head_attention.1} parent=0 // pred_check_branch
    %10 = sbr.rel (0) target = $region5
  $region4: #{multi_head_attention.1} parent=0 // pred_region
    _
  $region5: #{multi_head_attention.1} parent=0 // pred_fallthru
    _
  // Predicated region
  $region6: #{multi_head_attention.1} parent=0 // pred_check
    _
  $region7: #{multi_head_attention.1} parent=0 // pred_check_branch
    %12 = sbr.rel (0) target = $region9
  $region8: #{multi_head_attention.1} parent=0 // pred_region
    _
  $region9: #{multi_head_attention.1} parent=0 // pred_fallthru
    _
  // Predicated region
  $region10: #{multi_head_attention.1} parent=0 // pred_check
    _
  $region11: #{multi_head_attention.1} parent=0 // pred_check_branch
    %14 = sbr.rel (0) target = $region13
  $region12: #{multi_head_attention.1} parent=0 // pred_region
    _
  $region13: #{multi_head_attention.1} parent=0 // pred_fallthru
    _
  // Predicated region
  $region14: #{multi_head_attention.1} parent=0 // pred_check
    _
  $region15: #{multi_head_attention.1} parent=0 // pred_check_branch
    %16 = sbr.rel (0) target = $region17
  $region16: #{multi_head_attention.1} parent=0 // pred_region
    _
  $region17: #{multi_head_attention.1} parent=0 // pred_fallthru
    _
  %v18 = vld [vmem:[%s0] sm:$0xf]
  %v19 = vld [vmem:[%s0 + $0x4] sm:$0xf]
  %v20 = vld [vmem:[%s1] sm:$0xf]
  %v21 = vld [vmem:[%s1 + $0x4] sm:$0xf]
  %v22 = vld [vmem:[%s1 + $0x8] sm:$0xf]
  %v23 = vld [vmem:[%s1 + $0xc] sm:$0xf]
  %v26 = vunpack.c.l.b16 %v18
  %v27 = vunpack.c.l.b16 %v19
  %v28 = vpack.c.b16 %v27, %v26
  %v33 = vunpack.c.l.b16 %v20
  %v34 = vunpack.c.l.b16 %v21
  %v35 = vunpack.c.l.b16 %v22
  %v36 = vunpack.c.l.b16 %v23
  %v37 = vpack.c.b16 %v34, %v33
  %v38 = vpack.c.b16 %v36, %v35
  %vm41 = vcmask 261120
  %v43 = vsel %vm41, %v28, 0
  %45 = vmatpush.bf16.msra.mxu0 0
  %46 = vmatpush.bf16.msra.mxu0 0
  %47 = vmatpush.bf16.msra.mxu0 0
  %48 = vmatpush.bf16.msra.mxu0 0
  %49 = vmatpush.bf16.msra.mxu0 0
  %50 = vmatpush.bf16.msra.mxu0 0
  %51 = vmatpush.bf16.msra.mxu0 %v38
  %52 = vmatpush.bf16.msra.mxu0 %v37
  %53 = vmatmul.bf16.gmra.mxu0 %v43
  %v54 = vpop.f32.mrf.mxu0
  %v55 = vadd.f32 0.0, %v54
  %v56 = vpop.f32.mrf.mxu0
  %v57 = vadd.f32 0.0, %v56
  %58 = vdwg.mxu0
  %v59 = vpack.c.bf16 %v55, %v55
  %v60 = vpack.c.bf16 %v57, %v57
  %v62 = vunpack.c.l.b16 %v59
  %v63 = vpack.c.b16 %v62, %v62
  %64 = vrot.lane.b32.xlu0 %v63, 112
  %v65 = vpop.permute.xlu0 %64
  %vm66 = vcmask 130048
  %v68 = vsel %vm66, %v59, 0
  %v71 = vsel %vm66, %v65, 0
  %73 = vmatpush.bf16.xpose.msra.mxu0 0
  %74 = vmatpush.bf16.xpose.msra.mxu0 0
  %75 = vmatpush.bf16.xpose.msra.mxu0 0
  %76 = vmatpush.bf16.xpose.msra.mxu0 0
  %77 = vmatpush.bf16.xpose.msra.mxu0 0
  %78 = vmatpush.bf16.xpose.msra.mxu0 0
  %79 = vmatpush.bf16.xpose.msra.mxu0 0
  %80 = vmatpush.bf16.xpose.msra.mxu0 %v71
  %81 = vmatmul.bf16.gmra.mxu0 %v68
  %v82 = vpop.f32.mrf.mxu0
  %v83 = vadd.f32 0.0, %v82
  %v84 = vpop.f32.mrf.mxu0
  %85 = vdwg.mxu0
  %v87 = vunpack.c.l.b16 %v60
  %v88 = vpack.c.b16 %v87, %v87
  %89 = vrot.lane.b32.xlu0 %v88, 112
  %v90 = vpop.permute.xlu0 %89
  %v92 = vsel %vm66, %v60, 0
  %v95 = vsel %vm66, %v90, 0
  %97 = vmatpush.bf16.xpose.msra.mxu0 0
  %98 = vmatpush.bf16.xpose.msra.mxu0 0
  %99 = vmatpush.bf16.xpose.msra.mxu0 0
  %100 = vmatpush.bf16.xpose.msra.mxu0 0
  %101 = vmatpush.bf16.xpose.msra.mxu0 0
  %102 = vmatpush.bf16.xpose.msra.mxu0 0
  %103 = vmatpush.bf16.xpose.msra.mxu0 0
  %104 = vmatpush.bf16.xpose.msra.mxu0 %v95
  %105 = vmatmul.bf16.gmra.mxu0 %v92
  %v106 = vpop.f32.mrf.mxu0
  %v107 = vadd.f32 0.0, %v106
  %v108 = vpop.f32.mrf.mxu0
  %109 = vdwg.mxu0
  %v110 = vlaneseq
  %v111 = vshrl.u32 %v110, 7
  %v112 = vlaneseq
  %v113 = vand.u32 %v112, 127
  %vm114 = vcmp.le.s32.totalorder %v113, %v111
  %v115 = vmul.f32 %v83, 0.70710677
  %v116 = vmul.f32 %v107, 0.70710677
  %v117 = vsel %vm114, 1, 0
  %vm118 = vcmp.eq.s32.totalorder %v117, 1
  %v119 = vsel %vm118, %v115, -inf
  %v120 = vsel %vm118, %v116, -inf
  %vm121 = vcmask 64512
  %v122 = vsel %vm121, %v119, -inf
  %v123 = vsel %vm121, %v120, -inf
  %v124 = vmax.f32 %v122, %v123
  %v125 = vsub.f32 %v119, %v124
  %v126 = vsub.f32 %v120, %v124
  %v127 = vmul.f32 %v125, 1.442695
  %v128 = vpow.pop %v127
  %v129 = vmul.f32 %v126, 1.442695
  %v130 = vpow.pop %v129
  %v131 = vsel %vm121, %v128, 0.0
  %v132 = vsel %vm121, %v130, 0.0
  %v133 = vadd.f32 %v131, %v132
  %v134 = vrcp.pop %v133
  %v135 = vmul.f32 %v128, %v134
  %v136 = vmul.f32 %v130, %v134
  %v137 = vpack.c.bf16 %v135, %v135
  %v138 = vpack.c.bf16 %v136, %v136
  %139 = vrot.lane.b32.xlu0 %v63, 96
  %v140 = vpop.permute.xlu0 %139
  %v142 = vsel %vm121, %v137, 0
  %vm144 = vcmask 1043456
  %v146 = vsel %vm144, %v140, 0
  %148 = vmatpush.bf16.msra.mxu0 0
  %149 = vmatpush.bf16.msra.mxu0 0
  %150 = vmatpush.bf16.msra.mxu0 0
  %151 = vmatpush.bf16.msra.mxu0 0
  %152 = vmatpush.bf16.msra.mxu0 0
  %153 = vmatpush.bf16.msra.mxu0 0
  %154 = vmatpush.bf16.msra.mxu0 0
  %155 = vmatpush.bf16.msra.mxu0 %v146
  %156 = vmatmul.bf16.gmra.mxu0 %v142
  %v157 = vpop.f32.mrf.mxu0
  %v158 = vadd.f32 0.0, %v157
  %v159 = vpop.f32.mrf.mxu0
  %160 = vdwg.mxu0
  %161 = vrot.lane.b32.xlu0 %v88, 96
  %v162 = vpop.permute.xlu0 %161
  %v164 = vsel %vm121, %v138, 0
  %v167 = vsel %vm144, %v162, 0
  %169 = vmatpush.bf16.msra.mxu0 0
  %170 = vmatpush.bf16.msra.mxu0 0
  %171 = vmatpush.bf16.msra.mxu0 0
  %172 = vmatpush.bf16.msra.mxu0 0
  %173 = vmatpush.bf16.msra.mxu0 0
  %174 = vmatpush.bf16.msra.mxu0 0
  %175 = vmatpush.bf16.msra.mxu0 0
  %176 = vmatpush.bf16.msra.mxu0 %v167
  %177 = vmatmul.bf16.gmra.mxu0 %v164
  %v178 = vpop.f32.mrf.mxu0
  %v179 = vadd.f32 0.0, %v178
  %v180 = vpop.f32.mrf.mxu0
  %181 = vdwg.mxu0
  %v182 = vpack.c.bf16 %v179, %v158
  %v183 = vld [vmem:[%s2] sm:$0xf]
  %v184 = vld [vmem:[%s2 + $0x4] sm:$0xf]
  %v185 = vld [vmem:[%s3] sm:$0x1]
  %v187 = vperm.slane %v185, 0
  %v191 = vunpack.c.l.b16 %v183
  %v192 = vunpack.c.l.b16 %v184
  %v193 = vpack.c.b16 %v192, %v191
  %v196 = vsel %vm66, %v182, 0
  %198 = vmatpush.bf16.msra.mxu0 0
  %199 = vmatpush.bf16.msra.mxu0 0
  %200 = vmatpush.bf16.msra.mxu0 0
  %201 = vmatpush.bf16.msra.mxu0 0
  %202 = vmatpush.bf16.msra.mxu0 0
  %203 = vmatpush.bf16.msra.mxu0 0
  %204 = vmatpush.bf16.msra.mxu0 0
  %205 = vmatpush.bf16.msra.mxu0 %v193
  %206 = vmatmul.bf16.gmra.mxu0 %v196
  %v207 = vpop.f32.mrf.mxu0
  %v208 = vadd.f32 %v187, %v207
  %v209 = vpop.f32.mrf.mxu0
  %v210 = vadd.f32 %v187, %v209
  %211 = vdwg.mxu0
  %212 = vst [vmem:[%s4] sm:$0xff] %v208
  %213 = vst [vmem:[%s4 + $0x8] sm:$0xff] %v210
  // Predicated region
  $region18: #{multi_head_attention.1} parent=0 // pred_check
    _
  $region19: #{multi_head_attention.1} parent=0 // pred_check_branch
    %215 = sbr.rel (0) target = $region21
  $region20: #{multi_head_attention.1} parent=0 // pred_region
    _
  $region21: #{multi_head_attention.1} parent=0 // pred_fallthru
    _
  // Predicated region
  $region22: #{multi_head_attention.1} parent=0 // pred_check
    _
  $region23: #{multi_head_attention.1} parent=0 // pred_check_branch
    %217 = sbr.rel (0) target = $region25
  $region24: #{multi_head_attention.1} parent=0 // pred_region
    _
  $region25: #{multi_head_attention.1} parent=0 // pred_fallthru
    _

</llo_original>
